<compile_context>
chip_gen: v6e
topology: v6e:2x2x1
jax: 0.10.0
libtpu: 0.0.40
codegen_flags: <defaults>
</compile_context>

<pallas_src>
import jax
import jax.numpy as jnp
from jax.experimental import pallas as pl
from jax.experimental.pallas import tpu as pltpu


def _round_up(x: int, m: int) -> int:
    return ((x + m - 1) // m) * m


# ----------------------------------------------------------------------------
# Pallas kernel: fused twin-critic MLP forward (all critics per grid step).
# ----------------------------------------------------------------------------
def _make_mlp_kernel(num_layers: int, n_critics: int, h0_pad: int,
                     out_actions: int):
    """Layer 0 fused across critics; remaining layers looped per critic."""

    def kernel(x_ref, *refs):
        # refs = (w0_cat, b0_cat, w1_stk, b1_stk, ..., out_ref)
        out_ref = refs[-1]
        p = refs[:-1]
        cdt = x_ref.dtype                      # native compute dtype for MXU
        x = x_ref[...]                         # (batch_tile, in_features)

        # ---- Layer 0: one matmul for all critics (fan_out = n_critics*h0_pad)
        acc0 = jnp.dot(x, p[0][...], preferred_element_type=jnp.float32)
        acc0 = acc0 + p[1][...].astype(jnp.float32)
        if num_layers > 1:
            acc0 = jnp.maximum(acc0, 0.0).astype(cdt)

        # ---- Remaining layers: per-critic (weights resident in VMEM).
        for c in range(n_critics):
            h = acc0[:, c * h0_pad:(c + 1) * h0_pad]   # static 128-aligned slice
            for li in range(1, num_layers):
                w = p[2 * li][c, :, :]                 # (fi_pad, fo_pad)
                b = p[2 * li + 1][c, :, :]             # (1, fo_pad)
                acc = jnp.dot(h, w, preferred_element_type=jnp.float32)
                acc = acc + b.astype(jnp.float32)
                if li < num_layers - 1:
                    h = jnp.maximum(acc, 0.0).astype(cdt)
                else:
                    h = acc
            # Lane-dense, unpadded writeback: transpose (XLU) and keep only the
            # real output rows -> stores (out_actions, batch_tile), not a
            # (batch_tile, 128) zero-padded slab.
            q_t = jnp.transpose(h)                     # (out_pad, batch_tile)
            out_ref[c, :, :] = q_t[:out_actions, :].astype(out_ref.dtype)

    return kernel


def _choose_batch_tile(batch: int) -> int:
    """Full block for small batches; otherwise lane-width 128-multiple tiles."""
    if batch <= 256:
        return batch                    # single full block (always layout-legal)
    # Prefer >= 2 grid steps (feeds both v7x TensorCores), cap at 1024 to
    # amortize the ~0.35us fixed per-step overhead.
    for tile in (1024, 512, 256, 128):
        if batch >= 2 * tile:
            return tile
    return 128


# ----------------------------------------------------------------------------
# Fused forward over all critics in one pallas_call.
# ----------------------------------------------------------------------------
def _fused_critic_forward(state, params, *, batch_tile=None):
    """params: list of (weights, biases) per critic; all critics share dims.

    Returns an array of shape (n_critics, out_actions, batch) -- transposed,
    lane-dense Q rows.
    """
    n_critics = len(params)
    num_layers = len(params[0][0])
    batch, in_features = state.shape
    out_actions = params[0][0][-1].shape[1]

    # Padded fan_out per layer (multiples of 128 -> lane-dense activations).
    fan_out = [params[0][0][li].shape[1] for li in range(num_layers)]
    fan_out_pad = [_round_up(f, 128) for f in fan_out]
    h0_pad = fan_out_pad[0]

    # ---- Layer 0: concatenate critics along fan_out (shared state input). ----
    w0_parts, b0_parts = [], []
    for c in range(n_critics):
        w, b = params[c][0][0], params[c][1][0]
        pad = h0_pad - w.shape[1]
        if pad:
            w = jnp.pad(w, ((0, 0), (0, pad)))
            b = jnp.pad(b, ((0, 0), (0, pad)))
        w0_parts.append(w)
        b0_parts.append(b)
    w0 = jnp.concatenate(w0_parts, axis=1)       # (in_features, n_critics*h0_pad)
    b0 = jnp.concatenate(b0_parts, axis=1)       # (1, n_critics*h0_pad)

    # ---- Layers 1..L-1: stack critics, zero-pad fan_in/fan_out to 128-mults. --
    stacked = []
    for li in range(1, num_layers):
        fi_pad, fo_pad = fan_out_pad[li - 1], fan_out_pad[li]
        ws, bs = [], []
        for c in range(n_critics):
            w, b = params[c][0][li], params[c][1][li]
            w = jnp.pad(w, ((0, fi_pad - w.shape[0]), (0, fo_pad - w.shape[1])))
            b = jnp.pad(b, ((0, 0), (0, fo_pad - b.shape[1])))
            ws.append(w)
            bs.append(b)
        stacked.append((jnp.stack(ws, axis=0),    # (n_critics, fi_pad, fo_pad)
                        jnp.stack(bs, axis=0)))   # (n_critics, 1, fo_pad)

    # ---- Batch tiling (pad batch so the tile divides it exactly). ------------
    if batch_tile is None:
        batch_tile = _choose_batch_tile(batch)
    assert batch_tile >= batch or batch_tile % 128 == 0, (
        "batch_tile must be the full batch or a multiple of 128")
    batch_p = _round_up(batch, batch_tile)
    if batch_p != batch:
        state = jnp.pad(state, ((0, batch_p - batch), (0, 0)))

    grid = (batch_p // batch_tile,)

    in_specs = [pl.BlockSpec((batch_tile, in_features), lambda i: (i, 0))]
    operands = [state]
    # Weights/biases: full blocks with CONSTANT index_maps -> DMA'd from HBM
    # once, resident in VMEM across every batch tile.
    # TODO(synk): on v7x with very wide hidden layers (>~1.5k f32), add
    # pipeline_mode=pl.Buffered(1) to these specs and re-derive vmem_limit.
    in_specs += [pl.BlockSpec(w0.shape, lambda i: (0, 0)),
                 pl.BlockSpec(b0.shape, lambda i: (0, 0))]
    operands += [w0, b0]
    for w_st, b_st in stacked:
        in_specs += [pl.BlockSpec(w_st.shape, lambda i: (0, 0, 0)),
                     pl.BlockSpec(b_st.shape, lambda i: (0, 0, 0))]
        operands += [w_st, b_st]

    out_specs = pl.BlockSpec((n_critics, out_actions, batch_tile),
                             lambda i: (0, 0, i))

    itemsize = jnp.dtype(state.dtype).itemsize
    flops = 2 * batch_p * (
        int(w0.shape[0]) * int(w0.shape[1])
        + sum(int(w.shape[0]) * int(w.shape[1]) * int(w.shape[2])
              for w, _ in stacked))
    bytes_accessed = (
        int(state.size) * itemsize
        + sum(int(op.size) * jnp.dtype(op.dtype).itemsize for op in operands[1:])
        + n_critics * out_actions * batch_p * itemsize)

    out = pl.pallas_call(
        _make_mlp_kernel(num_layers, n_critics, h0_pad, out_actions),
        out_shape=jax.ShapeDtypeStruct((n_critics, out_actions, batch_p),
                                       state.dtype),
        grid=grid,
        in_specs=in_specs,
        out_specs=out_specs,
        compiler_params=pltpu.CompilerParams(
            dimension_semantics=("parallel",),
            vmem_limit_bytes=32 * 1024 * 1024,
        ),
        cost_estimate=pl.CostEstimate(
            flops=int(flops),
            transcendentals=0,
            bytes_accessed=int(bytes_accessed),
        ),
    )(*operands)

    return out[:, :, :batch]            # (n_critics, out_actions, batch)


# ----------------------------------------------------------------------------
# Parameter construction (deterministic, PyTorch-Linear-style uniform init).
# ----------------------------------------------------------------------------
def init_critic_params(key, in_features, out_actions, hidden_layers, n_critics=2,
                       dtype=jnp.float32):
    """Builds params for n_critics independent MLPs (create_mlp semantics)."""
    params = []
    for _ in range(n_critics):
        layer_dims = [in_features] + list(hidden_layers) + [out_actions]
        weights, biases = [], []
        for li in range(len(layer_dims) - 1):
            fan_in, fan_out = layer_dims[li], layer_dims[li + 1]
            key, kw, kb = jax.random.split(key, 3)
            bound = 1.0 / jnp.sqrt(jnp.asarray(fan_in, dtype=jnp.float32))
            w = jax.random.uniform(kw, (fan_in, fan_out), dtype=dtype,
                                   minval=-bound, maxval=bound)
            b = jax.random.uniform(kb, (1, fan_out), dtype=dtype,
                                   minval=-bound, maxval=bound)
            weights.append(w)
            biases.append(b)
        params.append((weights, biases))
    return params


# ----------------------------------------------------------------------------
# ContinuousCritic forward API.
# ----------------------------------------------------------------------------
def continuous_critic_forward(state, params, *, batch_tile=None):
    """Returns a tuple of Q-value arrays, one (batch, out_actions) per critic."""
    q_all = _fused_critic_forward(state, params, batch_tile=batch_tile)
    return tuple(jnp.transpose(q_all[c]) for c in range(len(params)))


def continuous_critic_q1_forward(state, params, *, batch_tile=None):
    """Only the first critic (TD3 policy update path)."""
    q1 = _fused_critic_forward(state, params[:1], batch_tile=batch_tile)
    return jnp.transpose(q1[0])


# Plain-JAX reference for sanity checking (f32 math; use a looser tolerance if
# params/state are bf16, since the kernel keeps bf16 MXU inputs by design).
def _mlp_forward_ref(state, weights, biases):
    h = state.astype(jnp.float32)
    for i, (w, b) in enumerate(zip(weights, biases)):
        h = h @ w.astype(jnp.float32) + b.astype(jnp.float32)
        if i < len(weights) - 1:
            h = jnp.maximum(h, 0.0)
    return h.astype(state.dtype)


if __name__ == "__main__":
    # Small, module-consistent shapes:
    #   in_features=32, hidden_layers=[32, 32], out_actions=1, n_critics=2
    batch = 8
    in_features = 32
    hidden_layers = [32, 32]
    out_actions = 1
    n_critics = 2

    key = jax.random.PRNGKey(0)
    key_params, key_state = jax.random.split(key)

    params = init_critic_params(key_params, in_features, out_actions,
                                hidden_layers, n_critics=n_critics)
    state = jax.random.normal(key_state, (batch, in_features), dtype=jnp.float32)

    q_values = continuous_critic_forward(state, params)
    q_values = jax.block_until_ready(q_values)

    # Correctness check against a pure-JAX reference.
    for qi, (w, b) in zip(q_values, params):
        ref = _mlp_forward_ref(state, w, b)
        assert qi.shape == (batch, out_actions)
        assert jnp.allclose(qi, ref, atol=1e-5, rtol=1e-5), "mismatch vs reference"

    # q1_forward path as well.
    q1 = jax.block_until_ready(continuous_critic_q1_forward(state, params))
    assert q1.shape == (batch, out_actions)
    assert jnp.allclose(q1, q_values[0], atol=1e-6)

    print("KERNEL_OK")
</pallas_src>

<mosaic_0001>
module attributes {stable_mosaic.version = 11 : i64} {
  func.func @kernel(%arg0: i32, %arg1: memref<8x32xf32, #tpu.memory_space<vmem>>, %arg2: memref<32x256xf32, #tpu.memory_space<vmem>>, %arg3: memref<1x256xf32, #tpu.memory_space<vmem>>, %arg4: memref<2x128x128xf32, #tpu.memory_space<vmem>>, %arg5: memref<2x1x128xf32, #tpu.memory_space<vmem>>, %arg6: memref<2x128x128xf32, #tpu.memory_space<vmem>>, %arg7: memref<2x1x128xf32, #tpu.memory_space<vmem>>, %arg8: memref<2x1x8xf32, #tpu.memory_space<vmem>>) attributes {dimension_semantics = [#tpu.dimension_semantics<parallel>], iteration_bounds = array<i64: 1>, scalar_prefetch = 0 : i64, scratch_operands = 0 : i64, tpu.core_type = #tpu.core_type<tc>, window_params = [{transform_indices = @transform_0, window_bounds = array<i64: 8, 32>}, {pipeline_mode = #tpu.pipeline_mode<synchronous>, transform_indices = @transform_1, window_bounds = array<i64: 32, 256>}, {pipeline_mode = #tpu.pipeline_mode<synchronous>, transform_indices = @transform_2, window_bounds = array<i64: 1, 256>}, {pipeline_mode = #tpu.pipeline_mode<synchronous>, transform_indices = @transform_3, window_bounds = array<i64: 2, 128, 128>}, {pipeline_mode = #tpu.pipeline_mode<synchronous>, transform_indices = @transform_4, window_bounds = array<i64: 2, 1, 128>}, {pipeline_mode = #tpu.pipeline_mode<synchronous>, transform_indices = @transform_5, window_bounds = array<i64: 2, 128, 128>}, {pipeline_mode = #tpu.pipeline_mode<synchronous>, transform_indices = @transform_6, window_bounds = array<i64: 2, 1, 128>}, {transform_indices = @transform_7, window_bounds = array<i64: 2, 1, 8>}]} {
    %c0 = arith.constant 0 : index
    %c0_0 = arith.constant 0 : index
    %0 = vector.load %arg1[%c0, %c0_0] : memref<8x32xf32, #tpu.memory_space<vmem>>, vector<8x32xf32>
    %c0_1 = arith.constant 0 : index
    %c0_2 = arith.constant 0 : index
    %1 = vector.load %arg2[%c0_1, %c0_2] : memref<32x256xf32, #tpu.memory_space<vmem>>, vector<32x256xf32>
    %cst = arith.constant dense<0.000000e+00> : vector<8x256xf32>
    %2 = tpu.matmul %0, %1, %cst {dimension_numbers = #tpu.dot_dimension_numbers<[1], [0], [0], [1], [0, 0, 1, 1], [], []>} : vector<8x32xf32>, vector<32x256xf32>, vector<8x256xf32> -> vector<8x256xf32>
    %c0_3 = arith.constant 0 : index
    %c0_4 = arith.constant 0 : index
    %3 = vector.load %arg3[%c0_3, %c0_4] : memref<1x256xf32, #tpu.memory_space<vmem>>, vector<1x256xf32>
    %4 = vector.broadcast %3 : vector<1x256xf32> to vector<8x256xf32>
    %5 = arith.addf %2, %4 : vector<8x256xf32>
    %cst_5 = arith.constant 0.000000e+00 : f32
    %6 = vector.broadcast %cst_5 : f32 to vector<8x256xf32>
    %7 = arith.maximumf %5, %6 : vector<8x256xf32>
    %8 = vector.extract_strided_slice %7 {offsets = [0, 0], sizes = [8, 128], strides = [1, 1]} : vector<8x256xf32> to vector<8x128xf32>
    %c0_6 = arith.constant 0 : index
    %c0_7 = arith.constant 0 : index
    %c0_8 = arith.constant 0 : index
    %9 = vector.load %arg4[%c0_6, %c0_7, %c0_8] : memref<2x128x128xf32, #tpu.memory_space<vmem>>, vector<1x128x128xf32>
    %10 = vector.shape_cast %9 : vector<1x128x128xf32> to vector<128x128xf32>
    %c0_9 = arith.constant 0 : index
    %c0_10 = arith.constant 0 : index
    %c0_11 = arith.constant 0 : index
    %11 = vector.load %arg5[%c0_9, %c0_10, %c0_11] : memref<2x1x128xf32, #tpu.memory_space<vmem>>, vector<1x1x128xf32>
    %12 = vector.shape_cast %11 : vector<1x1x128xf32> to vector<1x128xf32>
    %cst_12 = arith.constant dense<0.000000e+00> : vector<8x128xf32>
    %13 = tpu.matmul %8, %10, %cst_12 {dimension_numbers = #tpu.dot_dimension_numbers<[1], [0], [0], [1], [0, 0, 1, 1], [], []>} : vector<8x128xf32>, vector<128x128xf32>, vector<8x128xf32> -> vector<8x128xf32>
    %14 = vector.broadcast %12 : vector<1x128xf32> to vector<8x128xf32>
    %15 = arith.addf %13, %14 : vector<8x128xf32>
    %cst_13 = arith.constant 0.000000e+00 : f32
    %16 = vector.broadcast %cst_13 : f32 to vector<8x128xf32>
    %17 = arith.maximumf %15, %16 : vector<8x128xf32>
    %c0_14 = arith.constant 0 : index
    %c0_15 = arith.constant 0 : index
    %c0_16 = arith.constant 0 : index
    %18 = vector.load %arg6[%c0_14, %c0_15, %c0_16] : memref<2x128x128xf32, #tpu.memory_space<vmem>>, vector<1x128x128xf32>
    %19 = vector.shape_cast %18 : vector<1x128x128xf32> to vector<128x128xf32>
    %c0_17 = arith.constant 0 : index
    %c0_18 = arith.constant 0 : index
    %c0_19 = arith.constant 0 : index
    %20 = vector.load %arg7[%c0_17, %c0_18, %c0_19] : memref<2x1x128xf32, #tpu.memory_space<vmem>>, vector<1x1x128xf32>
    %21 = vector.shape_cast %20 : vector<1x1x128xf32> to vector<1x128xf32>
    %cst_20 = arith.constant dense<0.000000e+00> : vector<8x128xf32>
    %22 = tpu.matmul %17, %19, %cst_20 {dimension_numbers = #tpu.dot_dimension_numbers<[1], [0], [0], [1], [0, 0, 1, 1], [], []>} : vector<8x128xf32>, vector<128x128xf32>, vector<8x128xf32> -> vector<8x128xf32>
    %23 = vector.broadcast %21 : vector<1x128xf32> to vector<8x128xf32>
    %24 = arith.addf %22, %23 : vector<8x128xf32>
    %25 = tpu.transpose %24, [1, 0] : vector<8x128xf32> -> vector<128x8xf32>
    %26 = vector.extract_strided_slice %25 {offsets = [0, 0], sizes = [1, 8], strides = [1, 1]} : vector<128x8xf32> to vector<1x8xf32>
    %c0_21 = arith.constant 0 : index
    %c0_22 = arith.constant 0 : index
    %c0_23 = arith.constant 0 : index
    %27 = vector.load %arg8[%c0_21, %c0_22, %c0_23] : memref<2x1x8xf32, #tpu.memory_space<vmem>>, vector<1x1x8xf32>
    %28 = vector.shape_cast %27 : vector<1x1x8xf32> to vector<1x8xf32>
    %29 = vector.shape_cast %26 : vector<1x8xf32> to vector<1x1x8xf32>
    tpu.vector_store %arg8[%c0_21, %c0_22, %c0_23], %29 {strides = array<i32>} : memref<2x1x8xf32, #tpu.memory_space<vmem>>, vector<1x1x8xf32>,
    %30 = vector.extract_strided_slice %7 {offsets = [0, 128], sizes = [8, 128], strides = [1, 1]} : vector<8x256xf32> to vector<8x128xf32>
    %c1 = arith.constant 1 : index
    %c0_24 = arith.constant 0 : index
    %c0_25 = arith.constant 0 : index
    %31 = vector.load %arg4[%c1, %c0_24, %c0_25] : memref<2x128x128xf32, #tpu.memory_space<vmem>>, vector<1x128x128xf32>
    %32 = vector.shape_cast %31 : vector<1x128x128xf32> to vector<128x128xf32>
    %c1_26 = arith.constant 1 : index
    %c0_27 = arith.constant 0 : index
    %c0_28 = arith.constant 0 : index
    %33 = vector.load %arg5[%c1_26, %c0_27, %c0_28] : memref<2x1x128xf32, #tpu.memory_space<vmem>>, vector<1x1x128xf32>
    %34 = vector.shape_cast %33 : vector<1x1x128xf32> to vector<1x128xf32>
    %cst_29 = arith.constant dense<0.000000e+00> : vector<8x128xf32>
    %35 = tpu.matmul %30, %32, %cst_29 {dimension_numbers = #tpu.dot_dimension_numbers<[1], [0], [0], [1], [0, 0, 1, 1], [], []>} : vector<8x128xf32>, vector<128x128xf32>, vector<8x128xf32> -> vector<8x128xf32>
    %36 = vector.broadcast %34 : vector<1x128xf32> to vector<8x128xf32>
    %37 = arith.addf %35, %36 : vector<8x128xf32>
    %cst_30 = arith.constant 0.000000e+00 : f32
    %38 = vector.broadcast %cst_30 : f32 to vector<8x128xf32>
    %39 = arith.maximumf %37, %38 : vector<8x128xf32>
    %c1_31 = arith.constant 1 : index
    %c0_32 = arith.constant 0 : index
    %c0_33 = arith.constant 0 : index
    %40 = vector.load %arg6[%c1_31, %c0_32, %c0_33] : memref<2x128x128xf32, #tpu.memory_space<vmem>>, vector<1x128x128xf32>
    %41 = vector.shape_cast %40 : vector<1x128x128xf32> to vector<128x128xf32>
    %c1_34 = arith.constant 1 : index
    %c0_35 = arith.constant 0 : index
    %c0_36 = arith.constant 0 : index
    %42 = vector.load %arg7[%c1_34, %c0_35, %c0_36] : memref<2x1x128xf32, #tpu.memory_space<vmem>>, vector<1x1x128xf32>
    %43 = vector.shape_cast %42 : vector<1x1x128xf32> to vector<1x128xf32>
    %cst_37 = arith.constant dense<0.000000e+00> : vector<8x128xf32>
    %44 = tpu.matmul %39, %41, %cst_37 {dimension_numbers = #tpu.dot_dimension_numbers<[1], [0], [0], [1], [0, 0, 1, 1], [], []>} : vector<8x128xf32>, vector<128x128xf32>, vector<8x128xf32> -> vector<8x128xf32>
    %45 = vector.broadcast %43 : vector<1x128xf32> to vector<8x128xf32>
    %46 = arith.addf %44, %45 : vector<8x128xf32>
    %47 = tpu.transpose %46, [1, 0] : vector<8x128xf32> -> vector<128x8xf32>
    %48 = vector.extract_strided_slice %47 {offsets = [0, 0], sizes = [1, 8], strides = [1, 1]} : vector<128x8xf32> to vector<1x8xf32>
    %c1_38 = arith.constant 1 : index
    %c0_39 = arith.constant 0 : index
    %c0_40 = arith.constant 0 : index
    %49 = vector.load %arg8[%c1_38, %c0_39, %c0_40] : memref<2x1x8xf32, #tpu.memory_space<vmem>>, vector<1x1x8xf32>
    %50 = vector.shape_cast %49 : vector<1x1x8xf32> to vector<1x8xf32>
    %51 = vector.shape_cast %48 : vector<1x8xf32> to vector<1x1x8xf32>
    tpu.vector_store %arg8[%c1_38, %c0_39, %c0_40], %51 {strides = array<i32>} : memref<2x1x8xf32, #tpu.memory_space<vmem>>, vector<1x1x8xf32>,
    return
  }
  func.func @transform_0(%arg0: i32) -> (i32, i32) {
    %c0_i32 = arith.constant 0 : i32
    %c0_i32_0 = arith.constant 0 : i32
    return %arg0, %c0_i32 : i32, i32
  }
  func.func @transform_1(%arg0: i32) -> (i32, i32) {
    %c0_i32 = arith.constant 0 : i32
    %c0_i32_0 = arith.constant 0 : i32
    %c0_i32_1 = arith.constant 0 : i32
    return %c0_i32, %c0_i32_0 : i32, i32
  }
  func.func @transform_2(%arg0: i32) -> (i32, i32) {
    %c0_i32 = arith.constant 0 : i32
    %c0_i32_0 = arith.constant 0 : i32
    %c0_i32_1 = arith.constant 0 : i32
    return %c0_i32, %c0_i32_0 : i32, i32
  }
  func.func @transform_3(%arg0: i32) -> (i32, i32, i32) {
    %c0_i32 = arith.constant 0 : i32
    %c0_i32_0 = arith.constant 0 : i32
    %c0_i32_1 = arith.constant 0 : i32
    %c0_i32_2 = arith.constant 0 : i32
    return %c0_i32, %c0_i32_0, %c0_i32_1 : i32, i32, i32
  }
  func.func @transform_4(%arg0: i32) -> (i32, i32, i32) {
    %c0_i32 = arith.constant 0 : i32
    %c0_i32_0 = arith.constant 0 : i32
    %c0_i32_1 = arith.constant 0 : i32
    %c0_i32_2 = arith.constant 0 : i32
    return %c0_i32, %c0_i32_0, %c0_i32_1 : i32, i32, i32
  }
  func.func @transform_5(%arg0: i32) -> (i32, i32, i32) {
    %c0_i32 = arith.constant 0 : i32
    %c0_i32_0 = arith.constant 0 : i32
    %c0_i32_1 = arith.constant 0 : i32
    %c0_i32_2 = arith.constant 0 : i32
    return %c0_i32, %c0_i32_0, %c0_i32_1 : i32, i32, i32
  }
  func.func @transform_6(%arg0: i32) -> (i32, i32, i32) {
    %c0_i32 = arith.constant 0 : i32
    %c0_i32_0 = arith.constant 0 : i32
    %c0_i32_1 = arith.constant 0 : i32
    %c0_i32_2 = arith.constant 0 : i32
    return %c0_i32, %c0_i32_0, %c0_i32_1 : i32, i32, i32
  }
  func.func @transform_7(%arg0: i32) -> (i32, i32, i32) {
    %c0_i32 = arith.constant 0 : i32
    %c0_i32_0 = arith.constant 0 : i32
    %c0_i32_1 = arith.constant 0 : i32
    return %c0_i32, %c0_i32_0, %arg0 : i32, i32, i32
  }
}

</mosaic_0001>

<llo_original>
// kernel: tpu_custom_call.1
$region0: #{tpu_custom_call.1}
  #allocation0 [shape = 'u32[]', space=smem, size = 0x4, offset = 0x4, fixed_abs, tag = 'smem constant byte address 0x4 - core index']
  #allocation1 [shape = 'u32[144,128]{1,0:T(1,128)}', space=vmem, size = 0x12000, scoped, tag = 'internal scratch']
  %s0 = inlined_call_operand.hbm [shape: f32[8,32], index: 0, kind: input, shape index: {}]
  %s1 = inlined_call_operand.hbm [shape: f32[32,256], index: 1, kind: input, shape index: {}]
  %s2 = inlined_call_operand.vmem [shape: f32[1,256], index: 2, kind: input, shape index: {}]
  %s3 = inlined_call_operand.hbm [shape: f32[2,128,128], index: 3, kind: input, shape index: {}]
  %s4 = inlined_call_operand.vmem [shape: f32[2,1,128], index: 4, kind: input, shape index: {}]
  %s5 = inlined_call_operand.hbm [shape: f32[2,128,128], index: 5, kind: input, shape index: {}]
  %s6 = inlined_call_operand.vmem [shape: f32[2,1,128], index: 6, kind: input, shape index: {}]
  %s7 = inlined_call_operand.hbm [shape: f32[2,1,8], index: 7, kind: output, shape index: {}]
  %s8 = sld [smem:[#allocation0]]
  $region54: #{tpu_custom_call.1} parent=0
    _
  %s10 = ssub.s32 1, %s8
  %s11 = scalar_select 0, %s10, %s8
  $region1: #{tpu_custom_call.1} parent=0
    #allocation2 [shape = 'u8[4096]{0}', space=vmem, size = 0x1000, scoped, tag = 'input window, operand 0, single buffered']
    #allocation3 [shape = 's32[1]{0}', space=sflag, size = 0x4, scoped, tag = 'scoped memory for tpu_custom_call.1']
    #allocation4 [shape = 's32[1]{0}', space=sflag, size = 0x4, scoped, tag = 'scoped memory for tpu_custom_call.1']
    #allocation5 [shape = 'u8[32768]{0}', space=vmem, size = 0x8000, scoped, tag = 'input window, operand 1, single buffered']
    #allocation6 [shape = 's32[1]{0}', space=sflag, size = 0x4, scoped, tag = 'scoped memory for tpu_custom_call.1']
    #allocation7 [shape = 'u8[131072]{0}', space=vmem, size = 0x20000, scoped, tag = 'input window, operand 3, single buffered']
    #allocation8 [shape = 'u8[131072]{0}', space=vmem, size = 0x20000, scoped, tag = 'input window, operand 5, single buffered']
    #allocation9 [shape = 's32[1]{0}', space=sflag, size = 0x4, scoped, tag = 'scoped memory for tpu_custom_call.1']
    #allocation10 [shape = 'u8[1024]{0}', space=vmem, size = 0x400, scoped, tag = 'output window, operand 0, single buffered']
    %12 = vsyncpa [#allocation3], 0
    %13 = vsyncpa [#allocation6], 0
    %14 = vsyncpa [#allocation9], 0
    %15 = vsyncpa [#allocation4], 0
    // Predicated region
    $region2: #{tpu_custom_call.1} parent=1 // pred_check
      _
    $region3: #{tpu_custom_call.1} parent=1 // pred_check_branch
      %17 = sbr.rel (0) target = $region5
    $region4: #{tpu_custom_call.1} parent=1 // pred_region
      %s19 = ssub.s32 128, 128
      %20 = vsyncadd [#allocation3], %s19
      %s22 = sshll.u32 [#allocation2], 4
      %s23 = int_to_ptr.vmem [resolvable:$true] %s22
      %25 = dma.hbm_to_vmem [thread:$0]  %s0, 128, %s23, [#allocation3]
    $region5: #{tpu_custom_call.1} parent=1 // pred_fallthru
      _
    // Predicated region
    $region6: #{tpu_custom_call.1} parent=1 // pred_check
      _
    $region7: #{tpu_custom_call.1} parent=1 // pred_check_branch
      %27 = sbr.rel (0) target = $region9
    $region8: #{tpu_custom_call.1} parent=1 // pred_region
      %s29 = ssub.s32 1024, 1024
      %30 = vsyncadd [#allocation6], %s29
      %s31 = sshll.u32 [#allocation5], 4
      %s32 = int_to_ptr.vmem [resolvable:$true] %s31
      %37 = dma.hbm_to_vmem [thread:$0]  %s1, 1024, %s32, [#allocation6], 256, 256, 16
    $region9: #{tpu_custom_call.1} parent=1 // pred_fallthru
      _
    // Predicated region
    $region10: #{tpu_custom_call.1} parent=1 // pred_check
      _
    $region11: #{tpu_custom_call.1} parent=1 // pred_check_branch
      %39 = sbr.rel (0) target = $region13
    $region12: #{tpu_custom_call.1} parent=1 // pred_region
      _
    $region13: #{tpu_custom_call.1} parent=1 // pred_fallthru
      _
    // Predicated region
    $region14: #{tpu_custom_call.1} parent=1 // pred_check
      _
    $region15: #{tpu_custom_call.1} parent=1 // pred_check_branch
      %41 = sbr.rel (0) target = $region17
    $region16: #{tpu_custom_call.1} parent=1 // pred_region
      %s43 = ssub.s32 4096, 4096
      %44 = vsyncadd [#allocation6], %s43
      %s45 = sshll.u32 [#allocation7], 4
      %s46 = int_to_ptr.vmem [resolvable:$true] %s45
      %51 = dma.hbm_to_vmem [thread:$0]  %s3, 4096, %s46, [#allocation6], 128, 128, 8
    $region17: #{tpu_custom_call.1} parent=1 // pred_fallthru
      _
    // Predicated region
    $region18: #{tpu_custom_call.1} parent=1 // pred_check
      _
    $region19: #{tpu_custom_call.1} parent=1 // pred_check_branch
      %53 = sbr.rel (0) target = $region21
    $region20: #{tpu_custom_call.1} parent=1 // pred_region
      _
    $region21: #{tpu_custom_call.1} parent=1 // pred_fallthru
      _
    // Predicated region
    $region22: #{tpu_custom_call.1} parent=1 // pred_check
      _
    $region23: #{tpu_custom_call.1} parent=1 // pred_check_branch
      %55 = sbr.rel (0) target = $region25
    $region24: #{tpu_custom_call.1} parent=1 // pred_region
      %s57 = ssub.s32 4096, 4096
      %58 = vsyncadd [#allocation9], %s57
      %s59 = sshll.u32 [#allocation8], 4
      %s60 = int_to_ptr.vmem [resolvable:$true] %s59
      %65 = dma.hbm_to_vmem [thread:$0]  %s5, 4096, %s60, [#allocation9], 128, 128, 8
    $region25: #{tpu_custom_call.1} parent=1 // pred_fallthru
      _
    // Predicated region
    $region26: #{tpu_custom_call.1} parent=1 // pred_check
      _
    $region27: #{tpu_custom_call.1} parent=1 // pred_check_branch
      %67 = sbr.rel (0) target = $region29
    $region28: #{tpu_custom_call.1} parent=1 // pred_region
      _
    $region29: #{tpu_custom_call.1} parent=1 // pred_fallthru
      _
    // Predicated region
    $region30: #{tpu_custom_call.1} parent=1 // pred_check
      _
    $region31: #{tpu_custom_call.1} parent=1 // pred_check_branch
      %69 = sbr.rel (0) target = $region33
    $region32: #{tpu_custom_call.1} parent=1 // pred_region
      %70 = dma.done [#allocation3], 128
    $region33: #{tpu_custom_call.1} parent=1 // pred_fallthru
      _
    // Predicated region
    $region34: #{tpu_custom_call.1} parent=1 // pred_check
      _
    $region35: #{tpu_custom_call.1} parent=1 // pred_check_branch
      %72 = sbr.rel (0) target = $region37
    $region36: #{tpu_custom_call.1} parent=1 // pred_region
      %73 = dma.done [#allocation6], 1024
    $region37: #{tpu_custom_call.1} parent=1 // pred_fallthru
      _
    // Predicated region
    $region38: #{tpu_custom_call.1} parent=1 // pred_check
      _
    $region39: #{tpu_custom_call.1} parent=1 // pred_check_branch
      %75 = sbr.rel (0) target = $region41
    $region40: #{tpu_custom_call.1} parent=1 // pred_region
      %76 = dma.done [#allocation6], 4096
    $region41: #{tpu_custom_call.1} parent=1 // pred_fallthru
      _
    // Predicated region
    $region42: #{tpu_custom_call.1} parent=1 // pred_check
      _
    $region43: #{tpu_custom_call.1} parent=1 // pred_check_branch
      %78 = sbr.rel (0) target = $region45
    $region44: #{tpu_custom_call.1} parent=1 // pred_region
      %79 = dma.done [#allocation9], 4096
    $region45: #{tpu_custom_call.1} parent=1 // pred_fallthru
      _
    %v80 = vld [vmem:[#allocation2] sm:$0xff]
    %v81 = vld [vmem:[#allocation5] sm:$0xff]
    %v82 = vld [vmem:[#allocation5 + $0x8] sm:$0xff]
    %v83 = vld [vmem:[#allocation5 + $0x10] sm:$0xff]
    %v84 = vld [vmem:[#allocation5 + $0x18] sm:$0xff]
    %v85 = vld [vmem:[#allocation5 + $0x20] sm:$0xff]
    %v86 = vld [vmem:[#allocation5 + $0x28] sm:$0xff]
    %v87 = vld [vmem:[#allocation5 + $0x30] sm:$0xff]
    %v88 = vld [vmem:[#allocation5 + $0x38] sm:$0xff]
    %v89 = vld [vmem:[%s2] sm:$0x3]
    %v91 = vlaneseq
    %v92 = vshrl.u32 %v91, 7
    %v93 = vsub.s32 0, %v92
    %v94 = vrot.slane %v89, %v93
    %v95 = vlaneseq
    %v96 = vshrl.u32 %v95, 7
    %v97 = vsub.s32 1, %v96
    %v98 = vrot.slane %v89, %v97
    %vm101 = vcmask 261120
    %v103 = vsel %vm101, %v80, 0
    %105 = vmatprep.subr.mxu0 0.0
    %106 = vmatpush1.msra.mxu0 0.0
    %107 = vmatprep.subr.mxu0 0.0
    %108 = vmatpush1.msra.mxu0 0.0
    %109 = vmatprep.subr.mxu0 0.0
    %110 = vmatpush1.msra.mxu0 0.0
    %111 = vmatprep.subr.mxu0 0.0
    %112 = vmatpush1.msra.mxu0 0.0
    %113 = vmatprep.subr.mxu0 0.0
    %114 = vmatpush1.msra.mxu0 0.0
    %115 = vmatprep.subr.mxu0 0.0
    %116 = vmatpush1.msra.mxu0 0.0
    %117 = vmatprep.subr.mxu0 0.0
    %118 = vmatpush1.msra.mxu0 0.0
    %119 = vmatprep.subr.mxu0 0.0
    %120 = vmatpush1.msra.mxu0 0.0
    %121 = vmatprep.subr.mxu0 0.0
    %122 = vmatpush1.msra.mxu0 0.0
    %123 = vmatprep.subr.mxu0 0.0
    %124 = vmatpush1.msra.mxu0 0.0
    %125 = vmatprep.subr.mxu0 0.0
    %126 = vmatpush1.msra.mxu0 0.0
    %127 = vmatprep.subr.mxu0 0.0
    %128 = vmatpush1.msra.mxu0 0.0
    %129 = vmatprep.subr.mxu0 %v88
    %130 = vmatpush1.msra.mxu0 %v87
    %131 = vmatprep.subr.mxu0 %v86
    %132 = vmatpush1.msra.mxu0 %v85
    %133 = vmatprep.subr.mxu0 %v84
    %134 = vmatpush1.msra.mxu0 %v83
    %135 = vmatprep.subr.mxu0 %v82
    %136 = vmatpush1.msra.mxu0 %v81
    %137 = vmatprep.subr.mxu0 0.0
    %138 = vmatpush2.msra.mxu0 0.0
    %139 = vmatprep.subr.mxu0 0.0
    %140 = vmatpush2.msra.mxu0 0.0
    %141 = vmatprep.subr.mxu0 0.0
    %142 = vmatpush2.msra.mxu0 0.0
    %143 = vmatprep.subr.mxu0 0.0
    %144 = vmatpush2.msra.mxu0 0.0
    %145 = vmatprep.subr.mxu0 0.0
    %146 = vmatpush2.msra.mxu0 0.0
    %147 = vmatprep.subr.mxu0 0.0
    %148 = vmatpush2.msra.mxu0 0.0
    %149 = vmatprep.subr.mxu0 0.0
    %150 = vmatpush2.msra.mxu0 0.0
    %151 = vmatprep.subr.mxu0 0.0
    %152 = vmatpush2.msra.mxu0 0.0
    %153 = vmatprep.subr.mxu0 0.0
    %154 = vmatpush2.msra.mxu0 0.0
    %155 = vmatprep.subr.mxu0 0.0
    %156 = vmatpush2.msra.mxu0 0.0
    %157 = vmatprep.subr.mxu0 0.0
    %158 = vmatpush2.msra.mxu0 0.0
    %159 = vmatprep.subr.mxu0 0.0
    %160 = vmatpush2.msra.mxu0 0.0
    %161 = vmatprep.subr.mxu0 0.0
    %162 = vmatpush2.msra.mxu0 0.0
    %163 = vmatprep.subr.mxu0 0.0
    %164 = vmatpush2.msra.mxu0 0.0
    %165 = vmatprep.subr.mxu0 0.0
    %166 = vmatpush2.msra.mxu0 0.0
    %167 = vmatprep.subr.mxu0 0.0
    %168 = vmatpush2.msra.mxu0 0.0
    %169 = vmatprep.mubr.f32.mxu0 0.0
    %170 = vmatmul.mubr.f32.gmra.mxu0 %v103
    %v171 = vpop.f32.mrf.mxu0
    %v172 = vadd.f32 %v94, %v171
    %v173 = vpop.f32.mrf.mxu0
    %v174 = vadd.f32 %v98, %v173
    %175 = vdwg.mxu0
    %v176 = vmax.f32 %v172, 0.0
    %v177 = vmax.f32 %v174, 0.0
    %v178 = vld [vmem:[#allocation7] sm:$0xff]
    %v179 = vld [vmem:[#allocation7 + $0x8] sm:$0xff]
    %v180 = vld [vmem:[#allocation7 + $0x10] sm:$0xff]
    %v181 = vld [vmem:[#allocation7 + $0x18] sm:$0xff]
    %v182 = vld [vmem:[#allocation7 + $0x20] sm:$0xff]
    %v183 = vld [vmem:[#allocation7 + $0x28] sm:$0xff]
    %v184 = vld [vmem:[#allocation7 + $0x30] sm:$0xff]
    %v185 = vld [vmem:[#allocation7 + $0x38] sm:$0xff]
    %v186 = vld [vmem:[#allocation7 + $0x40] sm:$0xff]
    %v187 = vld [vmem:[#allocation7 + $0x48] sm:$0xff]
    %v188 = vld [vmem:[#allocation7 + $0x50] sm:$0xff]
    %v189 = vld [vmem:[#allocation7 + $0x58] sm:$0xff]
    %v190 = vld [vmem:[#allocation7 + $0x60] sm:$0xff]
    %v191 = vld [vmem:[#allocation7 + $0x68] sm:$0xff]
    %v192 = vld [vmem:[#allocation7 + $0x70] sm:$0xff]
    %v193 = vld [vmem:[#allocation7 + $0x78] sm:$0xff]
    %v194 = vld [vmem:[%s4] sm:$0x1]
    %v196 = vlaneseq
    %v197 = vshrl.u32 %v196, 7
    %v198 = vsub.s32 0, %v197
    %v199 = vrot.slane %v194, %v198
    %201 = vmatprep.subr.mxu0 0.0
    %202 = vmatpush1.msra.mxu0 %v193
    %203 = vmatprep.subr.mxu0 0.0
    %204 = vmatpush1.msra.mxu0 %v192
    %205 = vmatprep.subr.mxu0 0.0
    %206 = vmatpush1.msra.mxu0 %v191
    %207 = vmatprep.subr.mxu0 0.0
    %208 = vmatpush1.msra.mxu0 %v190
    %209 = vmatprep.subr.mxu0 0.0
    %210 = vmatpush1.msra.mxu0 %v189
    %211 = vmatprep.subr.mxu0 0.0
    %212 = vmatpush1.msra.mxu0 %v188
    %213 = vmatprep.subr.mxu0 0.0
    %214 = vmatpush1.msra.mxu0 %v187
    %215 = vmatprep.subr.mxu0 0.0
    %216 = vmatpush1.msra.mxu0 %v186
    %217 = vmatprep.subr.mxu0 0.0
    %218 = vmatpush1.msra.mxu0 %v185
    %219 = vmatprep.subr.mxu0 0.0
    %220 = vmatpush1.msra.mxu0 %v184
    %221 = vmatprep.subr.mxu0 0.0
    %222 = vmatpush1.msra.mxu0 %v183
    %223 = vmatprep.subr.mxu0 0.0
    %224 = vmatpush1.msra.mxu0 %v182
    %225 = vmatprep.subr.mxu0 0.0
    %226 = vmatpush1.msra.mxu0 %v181
    %227 = vmatprep.subr.mxu0 0.0
    %228 = vmatpush1.msra.mxu0 %v180
    %229 = vmatprep.subr.mxu0 0.0
    %230 = vmatpush1.msra.mxu0 %v179
    %231 = vmatprep.subr.mxu0 0.0
    %232 = vmatpush1.msra.mxu0 %v178
    %233 = vmatprep.subr.mxu0 0.0
    %234 = vmatpush2.msra.mxu0 0.0
    %235 = vmatprep.subr.mxu0 0.0
    %236 = vmatpush2.msra.mxu0 0.0
    %237 = vmatprep.subr.mxu0 0.0
    %238 = vmatpush2.msra.mxu0 0.0
    %239 = vmatprep.subr.mxu0 0.0
    %240 = vmatpush2.msra.mxu0 0.0
    %241 = vmatprep.subr.mxu0 0.0
    %242 = vmatpush2.msra.mxu0 0.0
    %243 = vmatprep.subr.mxu0 0.0
    %244 = vmatpush2.msra.mxu0 0.0
    %245 = vmatprep.subr.mxu0 0.0
    %246 = vmatpush2.msra.mxu0 0.0
    %247 = vmatprep.subr.mxu0 0.0
    %248 = vmatpush2.msra.mxu0 0.0
    %249 = vmatprep.subr.mxu0 0.0
    %250 = vmatpush2.msra.mxu0 0.0
    %251 = vmatprep.subr.mxu0 0.0
    %252 = vmatpush2.msra.mxu0 0.0
    %253 = vmatprep.subr.mxu0 0.0
    %254 = vmatpush2.msra.mxu0 0.0
    %255 = vmatprep.subr.mxu0 0.0
    %256 = vmatpush2.msra.mxu0 0.0
    %257 = vmatprep.subr.mxu0 0.0
    %258 = vmatpush2.msra.mxu0 0.0
    %259 = vmatprep.subr.mxu0 0.0
    %260 = vmatpush2.msra.mxu0 0.0
    %261 = vmatprep.subr.mxu0 0.0
    %262 = vmatpush2.msra.mxu0 0.0
    %263 = vmatprep.subr.mxu0 0.0
    %264 = vmatpush2.msra.mxu0 0.0
    %265 = vmatprep.mubr.f32.mxu0 0.0
    %266 = vmatmul.mubr.f32.gmra.mxu0 %v176
    %v267 = vpop.f32.mrf.mxu0
    %v268 = vadd.f32 %v199, %v267
    %v269 = vpop.f32.mrf.mxu0
    %270 = vdwg.mxu0
    %v271 = vmax.f32 %v268, 0.0
    %v272 = vld [vmem:[#allocation8] sm:$0xff]
    %v273 = vld [vmem:[#allocation8 + $0x8] sm:$0xff]
    %v274 = vld [vmem:[#allocation8 + $0x10] sm:$0xff]
    %v275 = vld [vmem:[#allocation8 + $0x18] sm:$0xff]
    %v276 = vld [vmem:[#allocation8 + $0x20] sm:$0xff]
    %v277 = vld [vmem:[#allocation8 + $0x28] sm:$0xff]
    %v278 = vld [vmem:[#allocation8 + $0x30] sm:$0xff]
    %v279 = vld [vmem:[#allocation8 + $0x38] sm:$0xff]
    %v280 = vld [vmem:[#allocation8 + $0x40] sm:$0xff]
    %v281 = vld [vmem:[#allocation8 + $0x48] sm:$0xff]
    %v282 = vld [vmem:[#allocation8 + $0x50] sm:$0xff]
    %v283 = vld [vmem:[#allocation8 + $0x58] sm:$0xff]
    %v284 = vld [vmem:[#allocation8 + $0x60] sm:$0xff]
    %v285 = vld [vmem:[#allocation8 + $0x68] sm:$0xff]
    %v286 = vld [vmem:[#allocation8 + $0x70] sm:$0xff]
    %v287 = vld [vmem:[#allocation8 + $0x78] sm:$0xff]
    %v288 = vld [vmem:[%s6] sm:$0x1]
    %v290 = vlaneseq
    %v291 = vshrl.u32 %v290, 7
    %v292 = vsub.s32 0, %v291
    %v293 = vrot.slane %v288, %v292
    %295 = vmatprep.subr.mxu0 0.0
    %296 = vmatpush1.msra.mxu0 %v287
    %297 = vmatprep.subr.mxu0 0.0
    %298 = vmatpush1.msra.mxu0 %v286
    %299 = vmatprep.subr.mxu0 0.0
    %300 = vmatpush1.msra.mxu0 %v285
    %301 = vmatprep.subr.mxu0 0.0
    %302 = vmatpush1.msra.mxu0 %v284
    %303 = vmatprep.subr.mxu0 0.0
    %304 = vmatpush1.msra.mxu0 %v283
    %305 = vmatprep.subr.mxu0 0.0
    %306 = vmatpush1.msra.mxu0 %v282
    %307 = vmatprep.subr.mxu0 0.0
    %308 = vmatpush1.msra.mxu0 %v281
    %309 = vmatprep.subr.mxu0 0.0
    %310 = vmatpush1.msra.mxu0 %v280
    %311 = vmatprep.subr.mxu0 0.0
    %312 = vmatpush1.msra.mxu0 %v279
    %313 = vmatprep.subr.mxu0 0.0
    %314 = vmatpush1.msra.mxu0 %v278
    %315 = vmatprep.subr.mxu0 0.0
    %316 = vmatpush1.msra.mxu0 %v277
    %317 = vmatprep.subr.mxu0 0.0
    %318 = vmatpush1.msra.mxu0 %v276
    %319 = vmatprep.subr.mxu0 0.0
    %320 = vmatpush1.msra.mxu0 %v275
    %321 = vmatprep.subr.mxu0 0.0
    %322 = vmatpush1.msra.mxu0 %v274
    %323 = vmatprep.subr.mxu0 0.0
    %324 = vmatpush1.msra.mxu0 %v273
    %325 = vmatprep.subr.mxu0 0.0
    %326 = vmatpush1.msra.mxu0 %v272
    %327 = vmatprep.subr.mxu0 0.0
    %328 = vmatpush2.msra.mxu0 0.0
    %329 = vmatprep.subr.mxu0 0.0
    %330 = vmatpush2.msra.mxu0 0.0
    %331 = vmatprep.subr.mxu0 0.0
    %332 = vmatpush2.msra.mxu0 0.0
    %333 = vmatprep.subr.mxu0 0.0
    %334 = vmatpush2.msra.mxu0 0.0
    %335 = vmatprep.subr.mxu0 0.0
    %336 = vmatpush2.msra.mxu0 0.0
    %337 = vmatprep.subr.mxu0 0.0
    %338 = vmatpush2.msra.mxu0 0.0
    %339 = vmatprep.subr.mxu0 0.0
    %340 = vmatpush2.msra.mxu0 0.0
    %341 = vmatprep.subr.mxu0 0.0
    %342 = vmatpush2.msra.mxu0 0.0
    %343 = vmatprep.subr.mxu0 0.0
    %344 = vmatpush2.msra.mxu0 0.0
    %345 = vmatprep.subr.mxu0 0.0
    %346 = vmatpush2.msra.mxu0 0.0
    %347 = vmatprep.subr.mxu0 0.0
    %348 = vmatpush2.msra.mxu0 0.0
    %349 = vmatprep.subr.mxu0 0.0
    %350 = vmatpush2.msra.mxu0 0.0
    %351 = vmatprep.subr.mxu0 0.0
    %352 = vmatpush2.msra.mxu0 0.0
    %353 = vmatprep.subr.mxu0 0.0
    %354 = vmatpush2.msra.mxu0 0.0
    %355 = vmatprep.subr.mxu0 0.0
    %356 = vmatpush2.msra.mxu0 0.0
    %357 = vmatprep.subr.mxu0 0.0
    %358 = vmatpush2.msra.mxu0 0.0
    %359 = vmatprep.mubr.f32.mxu0 0.0
    %360 = vmatmul.mubr.f32.gmra.mxu0 %v271
    %v361 = vpop.f32.mrf.mxu0
    %v362 = vadd.f32 %v293, %v361
    %v363 = vpop.f32.mrf.mxu0
    %364 = vdwg.mxu0
    %365 = vxpose.xlu0.b32.start [1/16] %v362, 128
    %366 = vxpose.xlu0.b32.cont [2/16] 0.0, 128
    %367 = vxpose.xlu0.b32.cont [3/16] 0.0, 128
    %368 = vxpose.xlu0.b32.cont [4/16] 0.0, 128
    %369 = vxpose.xlu0.b32.cont [5/16] 0.0, 128
    %370 = vxpose.xlu0.b32.cont [6/16] 0.0, 128
    %371 = vxpose.xlu0.b32.cont [7/16] 0.0, 128
    %372 = vxpose.xlu0.b32.cont [8/16] 0.0, 128
    %373 = vxpose.xlu0.b32.cont [9/16] 0.0, 128
    %374 = vxpose.xlu0.b32.cont [10/16] 0.0, 128
    %375 = vxpose.xlu0.b32.cont [11/16] 0.0, 128
    %376 = vxpose.xlu0.b32.cont [12/16] 0.0, 128
    %377 = vxpose.xlu0.b32.cont [13/16] 0.0, 128
    %378 = vxpose.xlu0.b32.cont [14/16] 0.0, 128
    %379 = vxpose.xlu0.b32.cont [15/16] 0.0, 128
    %380 = vxpose.xlu0.b32.end [16/16] 0.0, 128
    %v381 = vpop.trf.xlu0
    %v382 = vpop.trf.xlu0
    %v383 = vpop.trf.xlu0
    %v384 = vpop.trf.xlu0
    %v385 = vpop.trf.xlu0
    %v386 = vpop.trf.xlu0
    %v387 = vpop.trf.xlu0
    %v388 = vpop.trf.xlu0
    %v389 = vpop.trf.xlu0
    %v390 = vpop.trf.xlu0
    %v391 = vpop.trf.xlu0
    %v392 = vpop.trf.xlu0
    %v393 = vpop.trf.xlu0
    %v394 = vpop.trf.xlu0
    %v395 = vpop.trf.xlu0
    %v396 = vpop.trf.xlu0
    %vm397 = vcmask 57344
    %398 = vst.msk [vmem:[#allocation10] sm:$0x1] %vm397, %v381
    %s399 = scalar_lea.vmem [#allocation7], 128
    %v400 = vld [vmem:[%s399] sm:$0xff]
    %v401 = vld [vmem:[%s399 + $0x8] sm:$0xff]
    %v402 = vld [vmem:[%s399 + $0x10] sm:$0xff]
    %v403 = vld [vmem:[%s399 + $0x18] sm:$0xff]
    %v404 = vld [vmem:[%s399 + $0x20] sm:$0xff]
    %v405 = vld [vmem:[%s399 + $0x28] sm:$0xff]
    %v406 = vld [vmem:[%s399 + $0x30] sm:$0xff]
    %v407 = vld [vmem:[%s399 + $0x38] sm:$0xff]
    %v408 = vld [vmem:[%s399 + $0x40] sm:$0xff]
    %v409 = vld [vmem:[%s399 + $0x48] sm:$0xff]
    %v410 = vld [vmem:[%s399 + $0x50] sm:$0xff]
    %v411 = vld [vmem:[%s399 + $0x58] sm:$0xff]
    %v412 = vld [vmem:[%s399 + $0x60] sm:$0xff]
    %v413 = vld [vmem:[%s399 + $0x68] sm:$0xff]
    %v414 = vld [vmem:[%s399 + $0x70] sm:$0xff]
    %v415 = vld [vmem:[%s399 + $0x78] sm:$0xff]
    %s416 = scalar_lea.vmem %s4, 1
    %v417 = vld [vmem:[%s416] sm:$0x1]
    %v419 = vlaneseq
    %v420 = vshrl.u32 %v419, 7
    %v421 = vsub.s32 0, %v420
    %v422 = vrot.slane %v417, %v421
    %424 = vmatprep.subr.mxu0 0.0
    %425 = vmatpush1.msra.mxu0 %v415
    %426 = vmatprep.subr.mxu0 0.0
    %427 = vmatpush1.msra.mxu0 %v414
    %428 = vmatprep.subr.mxu0 0.0
    %429 = vmatpush1.msra.mxu0 %v413
    %430 = vmatprep.subr.mxu0 0.0
    %431 = vmatpush1.msra.mxu0 %v412
    %432 = vmatprep.subr.mxu0 0.0
    %433 = vmatpush1.msra.mxu0 %v411
    %434 = vmatprep.subr.mxu0 0.0
    %435 = vmatpush1.msra.mxu0 %v410
    %436 = vmatprep.subr.mxu0 0.0
    %437 = vmatpush1.msra.mxu0 %v409
    %438 = vmatprep.subr.mxu0 0.0
    %439 = vmatpush1.msra.mxu0 %v408
    %440 = vmatprep.subr.mxu0 0.0
    %441 = vmatpush1.msra.mxu0 %v407
    %442 = vmatprep.subr.mxu0 0.0
    %443 = vmatpush1.msra.mxu0 %v406
    %444 = vmatprep.subr.mxu0 0.0
    %445 = vmatpush1.msra.mxu0 %v405
    %446 = vmatprep.subr.mxu0 0.0
    %447 = vmatpush1.msra.mxu0 %v404
    %448 = vmatprep.subr.mxu0 0.0
    %449 = vmatpush1.msra.mxu0 %v403
    %450 = vmatprep.subr.mxu0 0.0
    %451 = vmatpush1.msra.mxu0 %v402
    %452 = vmatprep.subr.mxu0 0.0
    %453 = vmatpush1.msra.mxu0 %v401
    %454 = vmatprep.subr.mxu0 0.0
    %455 = vmatpush1.msra.mxu0 %v400
    %456 = vmatprep.subr.mxu0 0.0
    %457 = vmatpush2.msra.mxu0 0.0
    %458 = vmatprep.subr.mxu0 0.0
    %459 = vmatpush2.msra.mxu0 0.0
    %460 = vmatprep.subr.mxu0 0.0
    %461 = vmatpush2.msra.mxu0 0.0
    %462 = vmatprep.subr.mxu0 0.0
    %463 = vmatpush2.msra.mxu0 0.0
    %464 = vmatprep.subr.mxu0 0.0
    %465 = vmatpush2.msra.mxu0 0.0
    %466 = vmatprep.subr.mxu0 0.0
    %467 = vmatpush2.msra.mxu0 0.0
    %468 = vmatprep.subr.mxu0 0.0
    %469 = vmatpush2.msra.mxu0 0.0
    %470 = vmatprep.subr.mxu0 0.0
    %471 = vmatpush2.msra.mxu0 0.0
    %472 = vmatprep.subr.mxu0 0.0
    %473 = vmatpush2.msra.mxu0 0.0
    %474 = vmatprep.subr.mxu0 0.0
    %475 = vmatpush2.msra.mxu0 0.0
    %476 = vmatprep.subr.mxu0 0.0
    %477 = vmatpush2.msra.mxu0 0.0
    %478 = vmatprep.subr.mxu0 0.0
    %479 = vmatpush2.msra.mxu0 0.0
    %480 = vmatprep.subr.mxu0 0.0
    %481 = vmatpush2.msra.mxu0 0.0
    %482 = vmatprep.subr.mxu0 0.0
    %483 = vmatpush2.msra.mxu0 0.0
    %484 = vmatprep.subr.mxu0 0.0
    %485 = vmatpush2.msra.mxu0 0.0
    %486 = vmatprep.subr.mxu0 0.0
    %487 = vmatpush2.msra.mxu0 0.0
    %488 = vmatprep.mubr.f32.mxu0 0.0
    %489 = vmatmul.mubr.f32.gmra.mxu0 %v177
    %v490 = vpop.f32.mrf.mxu0
    %v491 = vadd.f32 %v422, %v490
    %v492 = vpop.f32.mrf.mxu0
    %493 = vdwg.mxu0
    %v494 = vmax.f32 %v491, 0.0
    %s495 = scalar_lea.vmem [#allocation8], 128
    %v496 = vld [vmem:[%s495] sm:$0xff]
    %v497 = vld [vmem:[%s495 + $0x8] sm:$0xff]
    %v498 = vld [vmem:[%s495 + $0x10] sm:$0xff]
    %v499 = vld [vmem:[%s495 + $0x18] sm:$0xff]
    %v500 = vld [vmem:[%s495 + $0x20] sm:$0xff]
    %v501 = vld [vmem:[%s495 + $0x28] sm:$0xff]
    %v502 = vld [vmem:[%s495 + $0x30] sm:$0xff]
    %v503 = vld [vmem:[%s495 + $0x38] sm:$0xff]
    %v504 = vld [vmem:[%s495 + $0x40] sm:$0xff]
    %v505 = vld [vmem:[%s495 + $0x48] sm:$0xff]
    %v506 = vld [vmem:[%s495 + $0x50] sm:$0xff]
    %v507 = vld [vmem:[%s495 + $0x58] sm:$0xff]
    %v508 = vld [vmem:[%s495 + $0x60] sm:$0xff]
    %v509 = vld [vmem:[%s495 + $0x68] sm:$0xff]
    %v510 = vld [vmem:[%s495 + $0x70] sm:$0xff]
    %v511 = vld [vmem:[%s495 + $0x78] sm:$0xff]
    %s512 = scalar_lea.vmem %s6, 1
    %v513 = vld [vmem:[%s512] sm:$0x1]
    %v515 = vlaneseq
    %v516 = vshrl.u32 %v515, 7
    %v517 = vsub.s32 0, %v516
    %v518 = vrot.slane %v513, %v517
    %520 = vmatprep.subr.mxu0 0.0
    %521 = vmatpush1.msra.mxu0 %v511
    %522 = vmatprep.subr.mxu0 0.0
    %523 = vmatpush1.msra.mxu0 %v510
    %524 = vmatprep.subr.mxu0 0.0
    %525 = vmatpush1.msra.mxu0 %v509
    %526 = vmatprep.subr.mxu0 0.0
    %527 = vmatpush1.msra.mxu0 %v508
    %528 = vmatprep.subr.mxu0 0.0
    %529 = vmatpush1.msra.mxu0 %v507
    %530 = vmatprep.subr.mxu0 0.0
    %531 = vmatpush1.msra.mxu0 %v506
    %532 = vmatprep.subr.mxu0 0.0
    %533 = vmatpush1.msra.mxu0 %v505
    %534 = vmatprep.subr.mxu0 0.0
    %535 = vmatpush1.msra.mxu0 %v504
    %536 = vmatprep.subr.mxu0 0.0
    %537 = vmatpush1.msra.mxu0 %v503
    %538 = vmatprep.subr.mxu0 0.0
    %539 = vmatpush1.msra.mxu0 %v502
    %540 = vmatprep.subr.mxu0 0.0
    %541 = vmatpush1.msra.mxu0 %v501
    %542 = vmatprep.subr.mxu0 0.0
    %543 = vmatpush1.msra.mxu0 %v500
    %544 = vmatprep.subr.mxu0 0.0
    %545 = vmatpush1.msra.mxu0 %v499
    %546 = vmatprep.subr.mxu0 0.0
    %547 = vmatpush1.msra.mxu0 %v498
    %548 = vmatprep.subr.mxu0 0.0
    %549 = vmatpush1.msra.mxu0 %v497
    %550 = vmatprep.subr.mxu0 0.0
    %551 = vmatpush1.msra.mxu0 %v496
    %552 = vmatprep.subr.mxu0 0.0
    %553 = vmatpush2.msra.mxu0 0.0
    %554 = vmatprep.subr.mxu0 0.0
    %555 = vmatpush2.msra.mxu0 0.0
    %556 = vmatprep.subr.mxu0 0.0
    %557 = vmatpush2.msra.mxu0 0.0
    %558 = vmatprep.subr.mxu0 0.0
    %559 = vmatpush2.msra.mxu0 0.0
    %560 = vmatprep.subr.mxu0 0.0
    %561 = vmatpush2.msra.mxu0 0.0
    %562 = vmatprep.subr.mxu0 0.0
    %563 = vmatpush2.msra.mxu0 0.0
    %564 = vmatprep.subr.mxu0 0.0
    %565 = vmatpush2.msra.mxu0 0.0
    %566 = vmatprep.subr.mxu0 0.0
    %567 = vmatpush2.msra.mxu0 0.0
    %568 = vmatprep.subr.mxu0 0.0
    %569 = vmatpush2.msra.mxu0 0.0
    %570 = vmatprep.subr.mxu0 0.0
    %571 = vmatpush2.msra.mxu0 0.0
    %572 = vmatprep.subr.mxu0 0.0
    %573 = vmatpush2.msra.mxu0 0.0
    %574 = vmatprep.subr.mxu0 0.0
    %575 = vmatpush2.msra.mxu0 0.0
    %576 = vmatprep.subr.mxu0 0.0
    %577 = vmatpush2.msra.mxu0 0.0
    %578 = vmatprep.subr.mxu0 0.0
    %579 = vmatpush2.msra.mxu0 0.0
    %580 = vmatprep.subr.mxu0 0.0
    %581 = vmatpush2.msra.mxu0 0.0
    %582 = vmatprep.subr.mxu0 0.0
    %583 = vmatpush2.msra.mxu0 0.0
    %584 = vmatprep.mubr.f32.mxu0 0.0
    %585 = vmatmul.mubr.f32.gmra.mxu0 %v494
    %v586 = vpop.f32.mrf.mxu0
    %v587 = vadd.f32 %v518, %v586
    %v588 = vpop.f32.mrf.mxu0
    %589 = vdwg.mxu0
    %590 = vxpose.xlu0.b32.start [1/16] %v587, 128
    %591 = vxpose.xlu0.b32.cont [2/16] 0.0, 128
    %592 = vxpose.xlu0.b32.cont [3/16] 0.0, 128
    %593 = vxpose.xlu0.b32.cont [4/16] 0.0, 128
    %594 = vxpose.xlu0.b32.cont [5/16] 0.0, 128
    %595 = vxpose.xlu0.b32.cont [6/16] 0.0, 128
    %596 = vxpose.xlu0.b32.cont [7/16] 0.0, 128
    %597 = vxpose.xlu0.b32.cont [8/16] 0.0, 128
    %598 = vxpose.xlu0.b32.cont [9/16] 0.0, 128
    %599 = vxpose.xlu0.b32.cont [10/16] 0.0, 128
    %600 = vxpose.xlu0.b32.cont [11/16] 0.0, 128
    %601 = vxpose.xlu0.b32.cont [12/16] 0.0, 128
    %602 = vxpose.xlu0.b32.cont [13/16] 0.0, 128
    %603 = vxpose.xlu0.b32.cont [14/16] 0.0, 128
    %604 = vxpose.xlu0.b32.cont [15/16] 0.0, 128
    %605 = vxpose.xlu0.b32.end [16/16] 0.0, 128
    %v606 = vpop.trf.xlu0
    %v607 = vpop.trf.xlu0
    %v608 = vpop.trf.xlu0
    %v609 = vpop.trf.xlu0
    %v610 = vpop.trf.xlu0
    %v611 = vpop.trf.xlu0
    %v612 = vpop.trf.xlu0
    %v613 = vpop.trf.xlu0
    %v614 = vpop.trf.xlu0
    %v615 = vpop.trf.xlu0
    %v616 = vpop.trf.xlu0
    %v617 = vpop.trf.xlu0
    %v618 = vpop.trf.xlu0
    %v619 = vpop.trf.xlu0
    %v620 = vpop.trf.xlu0
    %v621 = vpop.trf.xlu0
    %s622 = scalar_lea.vmem [#allocation10], 1
    %623 = vst.msk [vmem:[%s622] sm:$0x1] %vm397, %v606
    // Predicated region
    $region46: #{tpu_custom_call.1} parent=1 // pred_check
      _
    $region47: #{tpu_custom_call.1} parent=1 // pred_check_branch
      %625 = sbr.rel (0) target = $region49
    $region48: #{tpu_custom_call.1} parent=1 // pred_region
      %s627 = ssub.s32 32, 32
      %628 = vsyncadd [#allocation4], %s627
      %s629 = sshll.u32 [#allocation10], 4
      %s630 = int_to_ptr.vmem [resolvable:$true] %s629
      %635 = dma.vmem_to_hbm [thread:$0]  %s630, 32, %s7, [#allocation4], 16, 16, 1
    $region49: #{tpu_custom_call.1} parent=1 // pred_fallthru
      _
    // Predicated region
    $region50: #{tpu_custom_call.1} parent=1 // pred_check
      _
    $region51: #{tpu_custom_call.1} parent=1 // pred_check_branch
      %637 = sbr.rel (0) target = $region53
    $region52: #{tpu_custom_call.1} parent=1 // pred_region
      %638 = dma.done [#allocation4], 32
    $region53: #{tpu_custom_call.1} parent=1 // pred_fallthru
      _
    %639 = vsyncpa [#allocation3], 1
    %640 = vsyncpa [#allocation6], 1
    %641 = vsyncpa [#allocation9], 1
    %642 = vsyncpa [#allocation4], 1

</llo_original>
